<compile_context>
chip_gen: v7x
topology: tpu7x:2x2x1
jax: 0.10.0
libtpu: 0.0.40
codegen_flags: <defaults>
</compile_context>

<pallas_src>
import jax
import jax.numpy as jnp
from jax.experimental import pallas as pl
from jax.experimental.pallas import tpu as pltpu

_LANE = 128  # TPU lane width; alignment target for the output (store) dim


def _round_up(x, m):
    return (x + m - 1) // m * m


def _pad2d(a, rows, cols):
    r, c = a.shape
    if r == rows and c == cols:
        return a
    return jnp.pad(a, ((0, rows - r), (0, cols - c)))


# --------------------------- kernels -----------------------------------------

def _fused_kernel(x_ref, w1_ref, b1_ref, w2_ref, b2_ref, o_ref):
    """Resident-weights path: both weight matrices live in VMEM, one grid axis
    over batch tiles.  Two MXU matmuls + VPU bias/ReLU per tile."""
    h = jnp.dot(x_ref[...], w1_ref[...], preferred_element_type=jnp.float32)
    h = jnp.maximum(h + b1_ref[...], 0.0)
    if w2_ref.dtype != jnp.float32:
        # Low-precision weights: feed a matching LHS to the MXU (accumulation
        # stays f32 via preferred_element_type) -> avoids slow f32 MXU passes.
        h = h.astype(w2_ref.dtype)
    y = jnp.dot(h, w2_ref[...], preferred_element_type=jnp.float32) + b2_ref[...]
    o_ref[...] = y.astype(o_ref.dtype)


def _ktiled_kernel(x_ref, w1_ref, b1_ref, w2_ref, b2_ref, o_ref, acc_ref):
    """K-tiled path for large D_in: W1 is streamed in (tk, D_hid) slabs along a
    trailing 'arbitrary' grid axis, x @ W1 accumulates in f32 scratch, and the
    bias/ReLU/second-matmul/store happen on the last K step."""
    k = pl.program_id(1)

    @pl.when(k == 0)
    def _():
        acc_ref[...] = jnp.zeros_like(acc_ref)

    acc_ref[...] += jnp.dot(x_ref[...], w1_ref[...],
                            preferred_element_type=jnp.float32)

    @pl.when(k == pl.num_programs(1) - 1)
    def _():
        h = jnp.maximum(acc_ref[...] + b1_ref[...], 0.0)
        if w2_ref.dtype != jnp.float32:
            h = h.astype(w2_ref.dtype)
        y = jnp.dot(h, w2_ref[...], preferred_element_type=jnp.float32) + b2_ref[...]
        o_ref[...] = y.astype(o_ref.dtype)


# --------------------------- wrapper ------------------------------------------

def _vmem_budget_bytes():
    """Usable VMEM budget: physical capacity minus >=16 MiB headroom for Mosaic
    scratch/semaphores, never more than 3/4 of physical VMEM.
    ~48 MiB on v7x (64 MiB/TC), ~96 MiB on v5e/v6e (128 MiB)."""
    cap = 64 << 20  # conservative default (v7x per-TC physical VMEM)
    try:
        info = pltpu.get_tpu_info()
        cap = int(getattr(info, "vmem_capacity_bytes", cap))
    except Exception:
        pass
    return max(24 << 20, min(cap - (16 << 20), (cap * 3) // 4))


def projection_head(x, w1, b1, w2, b2, *, tm=None, _force_tk=None):
    """x: (B, D_in); w1: (D_in, D_hid); b1: (D_hid,); w2: (D_hid, D_out); b2: (D_out,).

    Returns relu(x @ w1 + b1) @ w2 + b2 with shape (B, D_out) in x.dtype.
    """
    B, D_in = x.shape
    D_hid = w1.shape[1]
    D_out = w2.shape[1]

    # Only the output (store) dim is padded to a lane multiple; contraction dims
    # use full-extent blocks, so no wrapper-side pads of x / W1 rows are needed.
    D_out_p = _round_up(D_out, _LANE)

    # ---- batch tile -----------------------------------------------------------
    if tm is None:
        if B <= 128:
            tm = max(8, _round_up(B, 8))                     # tiny batch: one tile
        else:
            # >= 4 batch tiles (>= 2 needed so v7x's 2 TensorCores both get work
            # and DMA overlaps compute); 256-row cap fills the MXU on all gens
            # and keeps padded-row waste / VMEM pressure small.
            tm = min(256, max(8, _round_up(pl.cdiv(B, 4), 8)))

    x_isz = jnp.dtype(x.dtype).itemsize
    w_isz = jnp.dtype(w1.dtype).itemsize
    o_isz = x_isz
    budget = _vmem_budget_bytes()

    def resident_bytes(tm_, weight_bufs):
        return (2 * tm_ * D_in * x_isz                             # x tile (double buffered)
                + weight_bufs * (D_in * D_hid + D_hid * D_out_p) * w_isz   # W1 + W2
                + weight_bufs * (D_hid + D_out_p) * w_isz          # biases
                + 2 * tm_ * D_out_p * o_isz                        # out tile (double buffered)
                + tm_ * D_hid * 4 + tm_ * D_out_p * 4)             # f32 intermediates

    def ktiled_bytes(tm_, tk_, weight_bufs):
        return (2 * tm_ * tk_ * x_isz                              # x K-slab
                + 2 * tk_ * D_hid * w_isz                          # W1 K-slab (streamed)
                + weight_bufs * (D_hid * D_out_p + D_hid + D_out_p) * w_isz
                + 2 * tm_ * D_out_p * o_isz
                + tm_ * D_hid * 4                                  # f32 accumulator scratch
                + tm_ * D_out_p * 4)

    def fits(n):
        return int(n * 1.2) + (2 << 20) <= budget

    # ---- choose resident-weights vs K-tiled path ------------------------------
    mode, tk = "fused", D_in
    if _force_tk is not None:
        mode = "ktiled"
        tk = _round_up(min(_force_tk, _round_up(D_in, _LANE)), _LANE)
    else:
        while True:
            if fits(resident_bytes(tm, 1)):
                mode, tk = "fused", D_in
                break
            tk = _round_up(D_in, _LANE)
            while tk > _LANE and not fits(ktiled_bytes(tm, tk, 1)):
                tk = _round_up(tk // 2, _LANE)
            mode = "ktiled"
            if fits(ktiled_bytes(tm, tk, 1)) or tm <= 8:
                break
            tm = max(8, _round_up(tm // 2, 8))   # shrink the batch tile and retry

    B_p = _round_up(B, tm)
    D_in_p = D_in if mode == "fused" else _round_up(D_in, tk)

    x_p = _pad2d(x, B_p, D_in_p)
    w1_p = _pad2d(w1, D_in_p, D_hid)
    w2_p = _pad2d(w2, D_hid, D_out_p)
    b1_p = b1.reshape(1, D_hid)
    b2_p = _pad2d(b2.reshape(1, D_out), 1, D_out_p)

    def run(single_buffer_weights):
        wb = 1 if single_buffer_weights else 2

        def const_spec(shape):
            idx = lambda *_: (0,) * len(shape)
            if single_buffer_weights:
                # Grid-invariant operand: a single VMEM buffer is enough.
                return pl.BlockSpec(shape, idx, pipeline_mode=pl.Buffered(1))
            return pl.BlockSpec(shape, idx)

        if mode == "fused":
            grid = (B_p // tm,)
            in_specs = [
                pl.BlockSpec((tm, D_in_p), lambda i: (i, 0)),   # x tile
                const_spec((D_in_p, D_hid)),                    # W1 (resident)
                const_spec((1, D_hid)),                         # b1
                const_spec((D_hid, D_out_p)),                   # W2 (resident)
                const_spec((1, D_out_p)),                       # b2
            ]
            out_specs = pl.BlockSpec((tm, D_out_p), lambda i: (i, 0))
            scratch_shapes = []
            kernel = _fused_kernel
            dims = ("parallel",)
            nbytes = resident_bytes(tm, wb)
        else:
            grid = (B_p // tm, D_in_p // tk)
            in_specs = [
                pl.BlockSpec((tm, tk), lambda i, k: (i, k)),     # x K-slab
                pl.BlockSpec((tk, D_hid), lambda i, k: (k, 0)),  # W1 K-slab (streamed)
                const_spec((1, D_hid)),                          # b1
                const_spec((D_hid, D_out_p)),                    # W2 (resident)
                const_spec((1, D_out_p)),                        # b2
            ]
            out_specs = pl.BlockSpec((tm, D_out_p), lambda i, k: (i, 0))
            scratch_shapes = [pltpu.VMEM((tm, D_hid), jnp.float32)]
            kernel = _ktiled_kernel
            dims = ("parallel", "arbitrary")
            nbytes = ktiled_bytes(tm, tk, wb)

        vmem_limit = min(int(nbytes * 1.25) + (2 << 20), budget)
        out = pl.pallas_call(
            kernel,
            out_shape=jax.ShapeDtypeStruct((B_p, D_out_p), x.dtype),
            grid_spec=pltpu.PrefetchScalarGridSpec(
                num_scalar_prefetch=0,
                grid=grid,
                in_specs=in_specs,
                out_specs=out_specs,
                scratch_shapes=scratch_shapes,
            ),
            compiler_params=pltpu.CompilerParams(
                dimension_semantics=dims,
                vmem_limit_bytes=vmem_limit,
            ),
        )(x_p, w1_p, b1_p, w2_p, b2_p)
        return jax.block_until_ready(out)

    try:
        out_p = run(True)
    except Exception:
        # pipeline_mode=pl.Buffered(1) not supported on this jax version:
        # retry with default (double-buffered) weight specs.
        out_p = run(False)

    return out_p[:B, :D_out]


if __name__ == "__main__":
    key_a, key_b = jax.random.split(jax.random.PRNGKey(0))

    def make_params(key, D_in, D_hid, D_out):
        kx, kw1, kb1, kw2, kb2 = jax.random.split(key, 5)
        lim1 = 1.0 / jnp.sqrt(D_in)
        lim2 = 1.0 / jnp.sqrt(D_hid)
        w1 = jax.random.uniform(kw1, (D_in, D_hid), jnp.float32, -lim1, lim1)
        b1 = jax.random.uniform(kb1, (D_hid,), jnp.float32, -lim1, lim1)
        w2 = jax.random.uniform(kw2, (D_hid, D_out), jnp.float32, -lim2, lim2)
        b2 = jax.random.uniform(kb2, (D_out,), jnp.float32, -lim2, lim2)
        return kx, w1, b1, w2, b2

    # 1) Small head (input/hidden/output scaled down from 2048/2048/128):
    #    exercises the resident-weights fused path.
    B, D_in, D_hid, D_out = 16, 32, 32, 16
    kx, w1, b1, w2, b2 = make_params(key_a, D_in, D_hid, D_out)
    x = jax.random.normal(kx, (B, D_in), dtype=jnp.float32)
    out = jax.block_until_ready(projection_head(x, w1, b1, w2, b2))
    ref = jnp.maximum(x @ w1 + b1, 0.0) @ w2 + b2
    assert out.shape == (B, D_out)
    assert jnp.allclose(out, ref, atol=1e-5, rtol=1e-5)

    # 2) Exercise the K-tiled fallback (large-D_in regime) at small shapes.
    B, D_in, D_hid, D_out = 64, 256, 64, 32
    kx, w1, b1, w2, b2 = make_params(key_b, D_in, D_hid, D_out)
    x = jax.random.normal(kx, (B, D_in), dtype=jnp.float32)
    out = jax.block_until_ready(
        projection_head(x, w1, b1, w2, b2, tm=32, _force_tk=128))
    ref = jnp.maximum(x @ w1 + b1, 0.0) @ w2 + b2
    assert out.shape == (B, D_out)
    assert jnp.allclose(out, ref, atol=1e-4, rtol=1e-4)

    print("KERNEL_OK")
</pallas_src>

<mosaic_0001>
module attributes {stable_mosaic.version = 11 : i64} {
  func.func @_fused_kernel(%arg0: i32, %arg1: memref<16x32xf32, #tpu.memory_space<vmem>>, %arg2: memref<32x32xf32, #tpu.memory_space<vmem>>, %arg3: memref<1x32xf32, #tpu.memory_space<vmem>>, %arg4: memref<32x128xf32, #tpu.memory_space<vmem>>, %arg5: memref<1x128xf32, #tpu.memory_space<vmem>>, %arg6: memref<16x128xf32, #tpu.memory_space<vmem>>) attributes {dimension_semantics = [#tpu.dimension_semantics<parallel>], iteration_bounds = array<i64: 1>, scalar_prefetch = 0 : i64, scratch_operands = 0 : i64, tpu.core_type = #tpu.core_type<tc>, window_params = [{transform_indices = @transform_0, window_bounds = array<i64: 16, 32>}, {pipeline_mode = #tpu.pipeline_mode<synchronous>, transform_indices = @transform_1, window_bounds = array<i64: 32, 32>}, {pipeline_mode = #tpu.pipeline_mode<synchronous>, transform_indices = @transform_2, window_bounds = array<i64: 1, 32>}, {pipeline_mode = #tpu.pipeline_mode<synchronous>, transform_indices = @transform_3, window_bounds = array<i64: 32, 128>}, {pipeline_mode = #tpu.pipeline_mode<synchronous>, transform_indices = @transform_4, window_bounds = array<i64: 1, 128>}, {transform_indices = @transform_5, window_bounds = array<i64: 16, 128>}]} {
    %c0 = arith.constant 0 : index
    %c0_0 = arith.constant 0 : index
    %0 = vector.load %arg1[%c0, %c0_0] : memref<16x32xf32, #tpu.memory_space<vmem>>, vector<16x32xf32>
    %c0_1 = arith.constant 0 : index
    %c0_2 = arith.constant 0 : index
    %1 = vector.load %arg2[%c0_1, %c0_2] : memref<32x32xf32, #tpu.memory_space<vmem>>, vector<32x32xf32>
    %cst = arith.constant dense<0.000000e+00> : vector<16x32xf32>
    %2 = tpu.matmul %0, %1, %cst {dimension_numbers = #tpu.dot_dimension_numbers<[1], [0], [0], [1], [0, 0, 1, 1], [], []>} : vector<16x32xf32>, vector<32x32xf32>, vector<16x32xf32> -> vector<16x32xf32>
    %c0_3 = arith.constant 0 : index
    %c0_4 = arith.constant 0 : index
    %3 = vector.load %arg3[%c0_3, %c0_4] : memref<1x32xf32, #tpu.memory_space<vmem>>, vector<1x32xf32>
    %4 = vector.broadcast %3 : vector<1x32xf32> to vector<16x32xf32>
    %5 = arith.addf %2, %4 : vector<16x32xf32>
    %cst_5 = arith.constant 0.000000e+00 : f32
    %6 = vector.broadcast %cst_5 : f32 to vector<16x32xf32>
    %7 = arith.maximumf %5, %6 : vector<16x32xf32>
    %c0_6 = arith.constant 0 : index
    %c0_7 = arith.constant 0 : index
    %8 = vector.load %arg4[%c0_6, %c0_7] : memref<32x128xf32, #tpu.memory_space<vmem>>, vector<32x128xf32>
    %cst_8 = arith.constant dense<0.000000e+00> : vector<16x128xf32>
    %9 = tpu.matmul %7, %8, %cst_8 {dimension_numbers = #tpu.dot_dimension_numbers<[1], [0], [0], [1], [0, 0, 1, 1], [], []>} : vector<16x32xf32>, vector<32x128xf32>, vector<16x128xf32> -> vector<16x128xf32>
    %c0_9 = arith.constant 0 : index
    %c0_10 = arith.constant 0 : index
    %10 = vector.load %arg5[%c0_9, %c0_10] : memref<1x128xf32, #tpu.memory_space<vmem>>, vector<1x128xf32>
    %11 = vector.broadcast %10 : vector<1x128xf32> to vector<16x128xf32>
    %12 = arith.addf %9, %11 : vector<16x128xf32>
    %c0_11 = arith.constant 0 : index
    %c0_12 = arith.constant 0 : index
    %13 = vector.load %arg6[%c0_11, %c0_12] : memref<16x128xf32, #tpu.memory_space<vmem>>, vector<16x128xf32>
    tpu.vector_store %arg6[%c0_11, %c0_12], %12 {strides = array<i32>} : memref<16x128xf32, #tpu.memory_space<vmem>>, vector<16x128xf32>,
    return
  }
  func.func @transform_0(%arg0: i32) -> (i32, i32) {
    %c0_i32 = arith.constant 0 : i32
    %c0_i32_0 = arith.constant 0 : i32
    return %arg0, %c0_i32 : i32, i32
  }
  func.func @transform_1(%arg0: i32) -> (i32, i32) {
    %c0_i32 = arith.constant 0 : i32
    %c0_i32_0 = arith.constant 0 : i32
    %c0_i32_1 = arith.constant 0 : i32
    return %c0_i32, %c0_i32_0 : i32, i32
  }
  func.func @transform_2(%arg0: i32) -> (i32, i32) {
    %c0_i32 = arith.constant 0 : i32
    %c0_i32_0 = arith.constant 0 : i32
    %c0_i32_1 = arith.constant 0 : i32
    return %c0_i32, %c0_i32_0 : i32, i32
  }
  func.func @transform_3(%arg0: i32) -> (i32, i32) {
    %c0_i32 = arith.constant 0 : i32
    %c0_i32_0 = arith.constant 0 : i32
    %c0_i32_1 = arith.constant 0 : i32
    return %c0_i32, %c0_i32_0 : i32, i32
  }
  func.func @transform_4(%arg0: i32) -> (i32, i32) {
    %c0_i32 = arith.constant 0 : i32
    %c0_i32_0 = arith.constant 0 : i32
    %c0_i32_1 = arith.constant 0 : i32
    return %c0_i32, %c0_i32_0 : i32, i32
  }
  func.func @transform_5(%arg0: i32) -> (i32, i32) {
    %c0_i32 = arith.constant 0 : i32
    %c0_i32_0 = arith.constant 0 : i32
    return %arg0, %c0_i32 : i32, i32
  }
}

module attributes {stable_mosaic.version = 11 : i64} {
  func.func @_fused_kernel(%arg0: i32, %arg1: memref<16x32xf32, #tpu.memory_space<vmem>>, %arg2: memref<32x32xf32, #tpu.memory_space<vmem>>, %arg3: memref<1x32xf32, #tpu.memory_space<vmem>>, %arg4: memref<32x128xf32, #tpu.memory_space<vmem>>, %arg5: memref<1x128xf32, #tpu.memory_space<vmem>>, %arg6: memref<16x128xf32, #tpu.memory_space<vmem>>) attributes {dimension_semantics = [#tpu.dimension_semantics<parallel>], iteration_bounds = array<i64: 1>, scalar_prefetch = 0 : i64, scratch_operands = 0 : i64, tpu.core_type = #tpu.core_type<tc>, window_params = [{transform_indices = @transform_0, window_bounds = array<i64: 16, 32>}, {pipeline_mode = #tpu.pipeline_mode<synchronous>, transform_indices = @transform_1, window_bounds = array<i64: 32, 32>}, {pipeline_mode = #tpu.pipeline_mode<synchronous>, transform_indices = @transform_2, window_bounds = array<i64: 1, 32>}, {pipeline_mode = #tpu.pipeline_mode<synchronous>, transform_indices = @transform_3, window_bounds = array<i64: 32, 128>}, {pipeline_mode = #tpu.pipeline_mode<synchronous>, transform_indices = @transform_4, window_bounds = array<i64: 1, 128>}, {transform_indices = @transform_5, window_bounds = array<i64: 16, 128>}]} {
    %c0 = arith.constant 0 : index
    %c0_0 = arith.constant 0 : index
    %0 = vector.load %arg1[%c0, %c0_0] : memref<16x32xf32, #tpu.memory_space<vmem>>, vector<16x32xf32>
    %c0_1 = arith.constant 0 : index
    %c0_2 = arith.constant 0 : index
    %1 = vector.load %arg2[%c0_1, %c0_2] : memref<32x32xf32, #tpu.memory_space<vmem>>, vector<32x32xf32>
    %cst = arith.constant dense<0.000000e+00> : vector<16x32xf32>
    %2 = tpu.matmul %0, %1, %cst {dimension_numbers = #tpu.dot_dimension_numbers<[1], [0], [0], [1], [0, 0, 1, 1], [], []>} : vector<16x32xf32>, vector<32x32xf32>, vector<16x32xf32> -> vector<16x32xf32>
    %c0_3 = arith.constant 0 : index
    %c0_4 = arith.constant 0 : index
    %3 = vector.load %arg3[%c0_3, %c0_4] : memref<1x32xf32, #tpu.memory_space<vmem>>, vector<1x32xf32>
    %4 = vector.broadcast %3 : vector<1x32xf32> to vector<16x32xf32>
    %5 = arith.addf %2, %4 : vector<16x32xf32>
    %cst_5 = arith.constant 0.000000e+00 : f32
    %6 = vector.broadcast %cst_5 : f32 to vector<16x32xf32>
    %7 = arith.maximumf %5, %6 : vector<16x32xf32>
    %c0_6 = arith.constant 0 : index
    %c0_7 = arith.constant 0 : index
    %8 = vector.load %arg4[%c0_6, %c0_7] : memref<32x128xf32, #tpu.memory_space<vmem>>, vector<32x128xf32>
    %cst_8 = arith.constant dense<0.000000e+00> : vector<16x128xf32>
    %9 = tpu.matmul %7, %8, %cst_8 {dimension_numbers = #tpu.dot_dimension_numbers<[1], [0], [0], [1], [0, 0, 1, 1], [], []>} : vector<16x32xf32>, vector<32x128xf32>, vector<16x128xf32> -> vector<16x128xf32>
    %c0_9 = arith.constant 0 : index
    %c0_10 = arith.constant 0 : index
    %10 = vector.load %arg5[%c0_9, %c0_10] : memref<1x128xf32, #tpu.memory_space<vmem>>, vector<1x128xf32>
    %11 = vector.broadcast %10 : vector<1x128xf32> to vector<16x128xf32>
    %12 = arith.addf %9, %11 : vector<16x128xf32>
    %c0_11 = arith.constant 0 : index
    %c0_12 = arith.constant 0 : index
    %13 = vector.load %arg6[%c0_11, %c0_12] : memref<16x128xf32, #tpu.memory_space<vmem>>, vector<16x128xf32>
    tpu.vector_store %arg6[%c0_11, %c0_12], %12 {strides = array<i32>} : memref<16x128xf32, #tpu.memory_space<vmem>>, vector<16x128xf32>,
    return
  }
  func.func @transform_0(%arg0: i32) -> (i32, i32) {
    %c0_i32 = arith.constant 0 : i32
    %c0_i32_0 = arith.constant 0 : i32
    return %arg0, %c0_i32 : i32, i32
  }
  func.func @transform_1(%arg0: i32) -> (i32, i32) {
    %c0_i32 = arith.constant 0 : i32
    %c0_i32_0 = arith.constant 0 : i32
    %c0_i32_1 = arith.constant 0 : i32
    return %c0_i32, %c0_i32_0 : i32, i32
  }
  func.func @transform_2(%arg0: i32) -> (i32, i32) {
    %c0_i32 = arith.constant 0 : i32
    %c0_i32_0 = arith.constant 0 : i32
    %c0_i32_1 = arith.constant 0 : i32
    return %c0_i32, %c0_i32_0 : i32, i32
  }
  func.func @transform_3(%arg0: i32) -> (i32, i32) {
    %c0_i32 = arith.constant 0 : i32
    %c0_i32_0 = arith.constant 0 : i32
    %c0_i32_1 = arith.constant 0 : i32
    return %c0_i32, %c0_i32_0 : i32, i32
  }
  func.func @transform_4(%arg0: i32) -> (i32, i32) {
    %c0_i32 = arith.constant 0 : i32
    %c0_i32_0 = arith.constant 0 : i32
    %c0_i32_1 = arith.constant 0 : i32
    return %c0_i32, %c0_i32_0 : i32, i32
  }
  func.func @transform_5(%arg0: i32) -> (i32, i32) {
    %c0_i32 = arith.constant 0 : i32
    %c0_i32_0 = arith.constant 0 : i32
    return %arg0, %c0_i32 : i32, i32
  }
}

</mosaic_0001>

<llo_original>
// kernel: tpu_custom_call.1
$region0: #{tpu_custom_call.1}
  #allocation0 [shape = 'u32[]', space=smem, size = 0x4, offset = 0x4, fixed_abs, tag = 'smem constant byte address 0x4 - core index']
  #allocation1 [shape = 'u32[144,128]{1,0:T(1,128)}', space=vmem, size = 0x12000, scoped, tag = 'internal scratch']
  %s0 = inlined_call_operand.hbm [shape: f32[16,32], index: 0, kind: input, shape index: {}]
  %s1 = inlined_call_operand.hbm [shape: f32[32,32], index: 1, kind: input, shape index: {}]
  %s2 = inlined_call_operand.vmem [shape: f32[1,32], index: 2, kind: input, shape index: {}]
  %s3 = inlined_call_operand.hbm [shape: f32[32,128], index: 3, kind: input, shape index: {}]
  %s4 = inlined_call_operand.vmem [shape: f32[1,128], index: 4, kind: input, shape index: {}]
  %s5 = inlined_call_operand.hbm [shape: f32[16,128], index: 5, kind: output, shape index: {}]
  %s6 = sld [smem:[#allocation0]]
  $region42: #{tpu_custom_call.1} parent=0
    _
  %s8 = ssub.s32 1, %s6
  %s9 = scalar_select 0, %s8, %s6
  $region1: #{tpu_custom_call.1} parent=0
    #allocation2 [shape = 'u8[8192]{0}', space=vmem, size = 0x2000, scoped, tag = 'input window, operand 0, single buffered']
    #allocation3 [shape = 's32[1]{0}', space=sflag, size = 0x4, scoped, tag = 'scoped memory for tpu_custom_call.1']
    #allocation4 [shape = 's32[1]{0}', space=sflag, size = 0x4, scoped, tag = 'scoped memory for tpu_custom_call.1']
    #allocation5 [shape = 'u8[16384]{0}', space=vmem, size = 0x4000, scoped, tag = 'input window, operand 1, single buffered']
    #allocation6 [shape = 's32[1]{0}', space=sflag, size = 0x4, scoped, tag = 'scoped memory for tpu_custom_call.1']
    #allocation7 [shape = 'u8[16384]{0}', space=vmem, size = 0x4000, scoped, tag = 'input window, operand 3, single buffered']
    #allocation8 [shape = 'u8[8192]{0}', space=vmem, size = 0x2000, scoped, tag = 'output window, operand 0, single buffered']
    %10 = vsyncpa [#allocation3], 0
    %11 = vsyncpa [#allocation6], 0
    %12 = vsyncpa [#allocation4], 0
    // Predicated region
    $region2: #{tpu_custom_call.1} parent=1 // pred_check
      _
    $region3: #{tpu_custom_call.1} parent=1 // pred_check_branch
      %14 = sbr.rel (0) target = $region5
    $region4: #{tpu_custom_call.1} parent=1 // pred_region
      %s16 = ssub.s32 256, 256
      %17 = vsyncadd [#allocation3], %s16
      %s18 = sshll.u32 [#allocation2], 4
      %s19 = int_to_ptr.vmem [resolvable:$true] %s18
      %24 = dma.hbm_to_vmem [thread:$0]  %s0, 256, %s19, [#allocation3], 128, 128, 8
    $region5: #{tpu_custom_call.1} parent=1 // pred_fallthru
      _
    // Predicated region
    $region6: #{tpu_custom_call.1} parent=1 // pred_check
      _
    $region7: #{tpu_custom_call.1} parent=1 // pred_check_branch
      %26 = sbr.rel (0) target = $region9
    $region8: #{tpu_custom_call.1} parent=1 // pred_region
      %s28 = ssub.s32 512, 512
      %29 = vsyncadd [#allocation6], %s28
      %s30 = sshll.u32 [#allocation5], 4
      %s31 = int_to_ptr.vmem [resolvable:$true] %s30
      %36 = dma.hbm_to_vmem [thread:$0]  %s1, 512, %s31, [#allocation6], 128, 128, 8
    $region9: #{tpu_custom_call.1} parent=1 // pred_fallthru
      _
    // Predicated region
    $region10: #{tpu_custom_call.1} parent=1 // pred_check
      _
    $region11: #{tpu_custom_call.1} parent=1 // pred_check_branch
      %38 = sbr.rel (0) target = $region13
    $region12: #{tpu_custom_call.1} parent=1 // pred_region
      _
    $region13: #{tpu_custom_call.1} parent=1 // pred_fallthru
      _
    // Predicated region
    $region14: #{tpu_custom_call.1} parent=1 // pred_check
      _
    $region15: #{tpu_custom_call.1} parent=1 // pred_check_branch
      %40 = sbr.rel (0) target = $region17
    $region16: #{tpu_custom_call.1} parent=1 // pred_region
      %s42 = ssub.s32 512, 512
      %43 = vsyncadd [#allocation6], %s42
      %s44 = sshll.u32 [#allocation7], 4
      %s45 = int_to_ptr.vmem [resolvable:$true] %s44
      %50 = dma.hbm_to_vmem [thread:$0]  %s3, 512, %s45, [#allocation6], 128, 128, 8
    $region17: #{tpu_custom_call.1} parent=1 // pred_fallthru
      _
    // Predicated region
    $region18: #{tpu_custom_call.1} parent=1 // pred_check
      _
    $region19: #{tpu_custom_call.1} parent=1 // pred_check_branch
      %52 = sbr.rel (0) target = $region21
    $region20: #{tpu_custom_call.1} parent=1 // pred_region
      _
    $region21: #{tpu_custom_call.1} parent=1 // pred_fallthru
      _
    // Predicated region
    $region22: #{tpu_custom_call.1} parent=1 // pred_check
      _
    $region23: #{tpu_custom_call.1} parent=1 // pred_check_branch
      %54 = sbr.rel (0) target = $region25
    $region24: #{tpu_custom_call.1} parent=1 // pred_region
      %55 = dma.done [#allocation3], 256
    $region25: #{tpu_custom_call.1} parent=1 // pred_fallthru
      _
    // Predicated region
    $region26: #{tpu_custom_call.1} parent=1 // pred_check
      _
    $region27: #{tpu_custom_call.1} parent=1 // pred_check_branch
      %57 = sbr.rel (0) target = $region29
    $region28: #{tpu_custom_call.1} parent=1 // pred_region
      %58 = dma.done [#allocation6], 512
    $region29: #{tpu_custom_call.1} parent=1 // pred_fallthru
      _
    // Predicated region
    $region30: #{tpu_custom_call.1} parent=1 // pred_check
      _
    $region31: #{tpu_custom_call.1} parent=1 // pred_check_branch
      %60 = sbr.rel (0) target = $region33
    $region32: #{tpu_custom_call.1} parent=1 // pred_region
      %61 = dma.done [#allocation6], 512
    $region33: #{tpu_custom_call.1} parent=1 // pred_fallthru
      _
    %v62 = vld [vmem:[#allocation2] sm:$0xff]
    %v63 = vld [vmem:[#allocation2 + $0x8] sm:$0xff]
    %v64 = vld [vmem:[#allocation5] sm:$0xff]
    %v65 = vld [vmem:[#allocation5 + $0x8] sm:$0xff]
    %v66 = vld [vmem:[#allocation5 + $0x10] sm:$0xff]
    %v67 = vld [vmem:[#allocation5 + $0x18] sm:$0xff]
    %v68 = vld [vmem:[%s2] sm:$0x1]
    %v70 = vlaneseq
    %v71 = vshrl.u32 %v70, 7
    %v72 = vsub.s32 0, %v71
    %v73 = vrot.slane %v68, %v72
    %vm75 = vcmask 261120
    %v77 = vsel %vm75, %v62, 0
    %v80 = vsel %vm75, %v63, 0
    %82 = vmatprep.subr.mxu0 0.0
    %83 = vmatpush1.msra.mxu0 %v64
    %84 = vmatprep.subr.mxu0 0.0
    %85 = vmatpush1.msra.mxu0 %v65
    %86 = vmatprep.subr.mxu0 0.0
    %87 = vmatpush1.msra.mxu0 %v66
    %88 = vmatprep.subr.mxu0 0.0
    %89 = vmatpush1.msra.mxu0 %v67
    %90 = vmatprep.subr.mxu0 0.0
    %91 = vmatpush1.msra.mxu0 0.0
    %92 = vmatprep.subr.mxu0 0.0
    %93 = vmatpush1.msra.mxu0 0.0
    %94 = vmatprep.subr.mxu0 0.0
    %95 = vmatpush1.msra.mxu0 0.0
    %96 = vmatprep.subr.mxu0 0.0
    %97 = vmatpush1.msra.mxu0 0.0
    %98 = vmatprep.subr.mxu0 0.0
    %99 = vmatpush1.msra.mxu0 0.0
    %100 = vmatprep.subr.mxu0 0.0
    %101 = vmatpush1.msra.mxu0 0.0
    %102 = vmatprep.subr.mxu0 0.0
    %103 = vmatpush1.msra.mxu0 0.0
    %104 = vmatprep.subr.mxu0 0.0
    %105 = vmatpush1.msra.mxu0 0.0
    %106 = vmatprep.subr.mxu0 0.0
    %107 = vmatpush1.msra.mxu0 0.0
    %108 = vmatprep.subr.mxu0 0.0
    %109 = vmatpush1.msra.mxu0 0.0
    %110 = vmatprep.subr.mxu0 0.0
    %111 = vmatpush1.msra.mxu0 0.0
    %112 = vmatprep.subr.mxu0 0.0
    %113 = vmatpush1.msra.mxu0 0.0
    %114 = vmatprep.subr.mxu0 0.0
    %115 = vmatpush1.msra.mxu0 0.0
    %116 = vmatprep.subr.mxu0 0.0
    %117 = vmatpush1.msra.mxu0 0.0
    %118 = vmatprep.subr.mxu0 0.0
    %119 = vmatpush1.msra.mxu0 0.0
    %120 = vmatprep.subr.mxu0 0.0
    %121 = vmatpush1.msra.mxu0 0.0
    %122 = vmatprep.subr.mxu0 0.0
    %123 = vmatpush1.msra.mxu0 0.0
    %124 = vmatprep.subr.mxu0 0.0
    %125 = vmatpush1.msra.mxu0 0.0
    %126 = vmatprep.subr.mxu0 0.0
    %127 = vmatpush1.msra.mxu0 0.0
    %128 = vmatprep.subr.mxu0 0.0
    %129 = vmatpush1.msra.mxu0 0.0
    %130 = vmatprep.subr.mxu0 0.0
    %131 = vmatpush1.msra.mxu0 0.0
    %132 = vmatprep.subr.mxu0 0.0
    %133 = vmatpush1.msra.mxu0 0.0
    %134 = vmatprep.subr.mxu0 0.0
    %135 = vmatpush1.msra.mxu0 0.0
    %136 = vmatprep.subr.mxu0 0.0
    %137 = vmatpush1.msra.mxu0 0.0
    %138 = vmatprep.subr.mxu0 0.0
    %139 = vmatpush1.msra.mxu0 0.0
    %140 = vmatprep.subr.mxu0 0.0
    %141 = vmatpush1.msra.mxu0 0.0
    %142 = vmatprep.subr.mxu0 0.0
    %143 = vmatpush1.msra.mxu0 0.0
    %144 = vmatprep.subr.mxu0 0.0
    %145 = vmatpush1.msra.mxu0 0.0
    %146 = vmatprep.mubr.f32.mxu0 0.0
    %147 = vmatmul.mubr.f32.gmra.mrb[0].mxu0 %v77
    %v148 = vpop.f32.mrb[0].mxu0
    %v149 = vadd.f32 %v73, %v148
    %v150 = vpop.f32.mrb[0].mxu0
    %151 = vmatprep.mubr.f32.mxu0 0.0
    %152 = vmatmul.mubr.f32.gmra.mrb[0].mxu0 %v80
    %v153 = vpop.f32.mrb[0].mxu0
    %v154 = vadd.f32 %v73, %v153
    %v155 = vpop.f32.mrb[0].mxu0
    %156 = vdwg.mxu0
    %v157 = vmax.f32 %v149, 0.0
    %v158 = vmax.f32 %v154, 0.0
    %v159 = vld [vmem:[#allocation7] sm:$0xff]
    %v160 = vld [vmem:[#allocation7 + $0x8] sm:$0xff]
    %v161 = vld [vmem:[#allocation7 + $0x10] sm:$0xff]
    %v162 = vld [vmem:[#allocation7 + $0x18] sm:$0xff]
    %v163 = vld [vmem:[%s4] sm:$0x1]
    %v165 = vlaneseq
    %v166 = vshrl.u32 %v165, 7
    %v167 = vsub.s32 0, %v166
    %v168 = vrot.slane %v163, %v167
    %v171 = vsel %vm75, %v157, 0
    %v174 = vsel %vm75, %v158, 0
    %176 = vmatprep.subr.mxu0 0.0
    %177 = vmatpush1.msra.mxu0 %v159
    %178 = vmatprep.subr.mxu0 0.0
    %179 = vmatpush1.msra.mxu0 %v160
    %180 = vmatprep.subr.mxu0 0.0
    %181 = vmatpush1.msra.mxu0 %v161
    %182 = vmatprep.subr.mxu0 0.0
    %183 = vmatpush1.msra.mxu0 %v162
    %184 = vmatprep.subr.mxu0 0.0
    %185 = vmatpush1.msra.mxu0 0.0
    %186 = vmatprep.subr.mxu0 0.0
    %187 = vmatpush1.msra.mxu0 0.0
    %188 = vmatprep.subr.mxu0 0.0
    %189 = vmatpush1.msra.mxu0 0.0
    %190 = vmatprep.subr.mxu0 0.0
    %191 = vmatpush1.msra.mxu0 0.0
    %192 = vmatprep.subr.mxu0 0.0
    %193 = vmatpush1.msra.mxu0 0.0
    %194 = vmatprep.subr.mxu0 0.0
    %195 = vmatpush1.msra.mxu0 0.0
    %196 = vmatprep.subr.mxu0 0.0
    %197 = vmatpush1.msra.mxu0 0.0
    %198 = vmatprep.subr.mxu0 0.0
    %199 = vmatpush1.msra.mxu0 0.0
    %200 = vmatprep.subr.mxu0 0.0
    %201 = vmatpush1.msra.mxu0 0.0
    %202 = vmatprep.subr.mxu0 0.0
    %203 = vmatpush1.msra.mxu0 0.0
    %204 = vmatprep.subr.mxu0 0.0
    %205 = vmatpush1.msra.mxu0 0.0
    %206 = vmatprep.subr.mxu0 0.0
    %207 = vmatpush1.msra.mxu0 0.0
    %208 = vmatprep.subr.mxu0 0.0
    %209 = vmatpush1.msra.mxu0 0.0
    %210 = vmatprep.subr.mxu0 0.0
    %211 = vmatpush1.msra.mxu0 0.0
    %212 = vmatprep.subr.mxu0 0.0
    %213 = vmatpush1.msra.mxu0 0.0
    %214 = vmatprep.subr.mxu0 0.0
    %215 = vmatpush1.msra.mxu0 0.0
    %216 = vmatprep.subr.mxu0 0.0
    %217 = vmatpush1.msra.mxu0 0.0
    %218 = vmatprep.subr.mxu0 0.0
    %219 = vmatpush1.msra.mxu0 0.0
    %220 = vmatprep.subr.mxu0 0.0
    %221 = vmatpush1.msra.mxu0 0.0
    %222 = vmatprep.subr.mxu0 0.0
    %223 = vmatpush1.msra.mxu0 0.0
    %224 = vmatprep.subr.mxu0 0.0
    %225 = vmatpush1.msra.mxu0 0.0
    %226 = vmatprep.subr.mxu0 0.0
    %227 = vmatpush1.msra.mxu0 0.0
    %228 = vmatprep.subr.mxu0 0.0
    %229 = vmatpush1.msra.mxu0 0.0
    %230 = vmatprep.subr.mxu0 0.0
    %231 = vmatpush1.msra.mxu0 0.0
    %232 = vmatprep.subr.mxu0 0.0
    %233 = vmatpush1.msra.mxu0 0.0
    %234 = vmatprep.subr.mxu0 0.0
    %235 = vmatpush1.msra.mxu0 0.0
    %236 = vmatprep.subr.mxu0 0.0
    %237 = vmatpush1.msra.mxu0 0.0
    %238 = vmatprep.subr.mxu0 0.0
    %239 = vmatpush1.msra.mxu0 0.0
    %240 = vmatprep.mubr.f32.mxu0 0.0
    %241 = vmatmul.mubr.f32.gmra.mrb[0].mxu0 %v171
    %v242 = vpop.f32.mrb[0].mxu0
    %v243 = vadd.f32 %v168, %v242
    %v244 = vpop.f32.mrb[0].mxu0
    %245 = vmatprep.mubr.f32.mxu0 0.0
    %246 = vmatmul.mubr.f32.gmra.mrb[0].mxu0 %v174
    %v247 = vpop.f32.mrb[0].mxu0
    %v248 = vadd.f32 %v168, %v247
    %v249 = vpop.f32.mrb[0].mxu0
    %250 = vdwg.mxu0
    %251 = vst [vmem:[#allocation8] sm:$0xff] %v243
    %252 = vst [vmem:[#allocation8 + $0x8] sm:$0xff] %v248
    // Predicated region
    $region34: #{tpu_custom_call.1} parent=1 // pred_check
      _
    $region35: #{tpu_custom_call.1} parent=1 // pred_check_branch
      %254 = sbr.rel (0) target = $region37
    $region36: #{tpu_custom_call.1} parent=1 // pred_region
      %s256 = ssub.s32 256, 256
      %257 = vsyncadd [#allocation4], %s256
      %s258 = sshll.u32 [#allocation8], 4
      %s259 = int_to_ptr.vmem [resolvable:$true] %s258
      %264 = dma.vmem_to_hbm [thread:$0]  %s259, 256, %s5, [#allocation4], 128, 128, 8
    $region37: #{tpu_custom_call.1} parent=1 // pred_fallthru
      _
    // Predicated region
    $region38: #{tpu_custom_call.1} parent=1 // pred_check
      _
    $region39: #{tpu_custom_call.1} parent=1 // pred_check_branch
      %266 = sbr.rel (0) target = $region41
    $region40: #{tpu_custom_call.1} parent=1 // pred_region
      %267 = dma.done [#allocation4], 256
    $region41: #{tpu_custom_call.1} parent=1 // pred_fallthru
      _
    %268 = vsyncpa [#allocation3], 1
    %269 = vsyncpa [#allocation6], 1
    %270 = vsyncpa [#allocation4], 1

// kernel: tpu_custom_call.1
$region0: #{tpu_custom_call.1}
  #allocation0 [shape = 'u32[]', space=smem, size = 0x4, offset = 0x4, fixed_abs, tag = 'smem constant byte address 0x4 - core index']
  #allocation1 [shape = 'u32[144,128]{1,0:T(1,128)}', space=vmem, size = 0x12000, scoped, tag = 'internal scratch']
  %s0 = inlined_call_operand.hbm [shape: f32[16,32], index: 0, kind: input, shape index: {}]
  %s1 = inlined_call_operand.hbm [shape: f32[32,32], index: 1, kind: input, shape index: {}]
  %s2 = inlined_call_operand.vmem [shape: f32[1,32], index: 2, kind: input, shape index: {}]
  %s3 = inlined_call_operand.hbm [shape: f32[32,128], index: 3, kind: input, shape index: {}]
  %s4 = inlined_call_operand.vmem [shape: f32[1,128], index: 4, kind: input, shape index: {}]
  %s5 = inlined_call_operand.hbm [shape: f32[16,128], index: 5, kind: output, shape index: {}]
  %s6 = sld [smem:[#allocation0]]
  $region42: #{tpu_custom_call.1} parent=0
    _
  %s8 = ssub.s32 1, %s6
  %s9 = scalar_select 0, %s8, %s6
  $region1: #{tpu_custom_call.1} parent=0
    #allocation2 [shape = 'u8[8192]{0}', space=vmem, size = 0x2000, scoped, tag = 'input window, operand 0, single buffered']
    #allocation3 [shape = 's32[1]{0}', space=sflag, size = 0x4, scoped, tag = 'scoped memory for tpu_custom_call.1']
    #allocation4 [shape = 's32[1]{0}', space=sflag, size = 0x4, scoped, tag = 'scoped memory for tpu_custom_call.1']
    #allocation5 [shape = 'u8[16384]{0}', space=vmem, size = 0x4000, scoped, tag = 'input window, operand 1, single buffered']
    #allocation6 [shape = 's32[1]{0}', space=sflag, size = 0x4, scoped, tag = 'scoped memory for tpu_custom_call.1']
    #allocation7 [shape = 'u8[16384]{0}', space=vmem, size = 0x4000, scoped, tag = 'input window, operand 3, single buffered']
    #allocation8 [shape = 'u8[8192]{0}', space=vmem, size = 0x2000, scoped, tag = 'output window, operand 0, single buffered']
    %10 = vsyncpa [#allocation3], 0
    %11 = vsyncpa [#allocation6], 0
    %12 = vsyncpa [#allocation4], 0
    // Predicated region
    $region2: #{tpu_custom_call.1} parent=1 // pred_check
      _
    $region3: #{tpu_custom_call.1} parent=1 // pred_check_branch
      %14 = sbr.rel (0) target = $region5
    $region4: #{tpu_custom_call.1} parent=1 // pred_region
      %s16 = ssub.s32 256, 256
      %17 = vsyncadd [#allocation3], %s16
      %s18 = sshll.u32 [#allocation2], 4
      %s19 = int_to_ptr.vmem [resolvable:$true] %s18
      %24 = dma.hbm_to_vmem [thread:$0]  %s0, 256, %s19, [#allocation3], 128, 128, 8
    $region5: #{tpu_custom_call.1} parent=1 // pred_fallthru
      _
    // Predicated region
    $region6: #{tpu_custom_call.1} parent=1 // pred_check
      _
    $region7: #{tpu_custom_call.1} parent=1 // pred_check_branch
      %26 = sbr.rel (0) target = $region9
    $region8: #{tpu_custom_call.1} parent=1 // pred_region
      %s28 = ssub.s32 512, 512
      %29 = vsyncadd [#allocation6], %s28
      %s30 = sshll.u32 [#allocation5], 4
      %s31 = int_to_ptr.vmem [resolvable:$true] %s30
      %36 = dma.hbm_to_vmem [thread:$0]  %s1, 512, %s31, [#allocation6], 128, 128, 8
    $region9: #{tpu_custom_call.1} parent=1 // pred_fallthru
      _
    // Predicated region
    $region10: #{tpu_custom_call.1} parent=1 // pred_check
      _
    $region11: #{tpu_custom_call.1} parent=1 // pred_check_branch
      %38 = sbr.rel (0) target = $region13
    $region12: #{tpu_custom_call.1} parent=1 // pred_region
      _
    $region13: #{tpu_custom_call.1} parent=1 // pred_fallthru
      _
    // Predicated region
    $region14: #{tpu_custom_call.1} parent=1 // pred_check
      _
    $region15: #{tpu_custom_call.1} parent=1 // pred_check_branch
      %40 = sbr.rel (0) target = $region17
    $region16: #{tpu_custom_call.1} parent=1 // pred_region
      %s42 = ssub.s32 512, 512
      %43 = vsyncadd [#allocation6], %s42
      %s44 = sshll.u32 [#allocation7], 4
      %s45 = int_to_ptr.vmem [resolvable:$true] %s44
      %50 = dma.hbm_to_vmem [thread:$0]  %s3, 512, %s45, [#allocation6], 128, 128, 8
    $region17: #{tpu_custom_call.1} parent=1 // pred_fallthru
      _
    // Predicated region
    $region18: #{tpu_custom_call.1} parent=1 // pred_check
      _
    $region19: #{tpu_custom_call.1} parent=1 // pred_check_branch
      %52 = sbr.rel (0) target = $region21
    $region20: #{tpu_custom_call.1} parent=1 // pred_region
      _
    $region21: #{tpu_custom_call.1} parent=1 // pred_fallthru
      _
    // Predicated region
    $region22: #{tpu_custom_call.1} parent=1 // pred_check
      _
    $region23: #{tpu_custom_call.1} parent=1 // pred_check_branch
      %54 = sbr.rel (0) target = $region25
    $region24: #{tpu_custom_call.1} parent=1 // pred_region
      %55 = dma.done [#allocation3], 256
    $region25: #{tpu_custom_call.1} parent=1 // pred_fallthru
      _
    // Predicated region
    $region26: #{tpu_custom_call.1} parent=1 // pred_check
      _
    $region27: #{tpu_custom_call.1} parent=1 // pred_check_branch
      %57 = sbr.rel (0) target = $region29
    $region28: #{tpu_custom_call.1} parent=1 // pred_region
      %58 = dma.done [#allocation6], 512
    $region29: #{tpu_custom_call.1} parent=1 // pred_fallthru
      _
    // Predicated region
    $region30: #{tpu_custom_call.1} parent=1 // pred_check
      _
    $region31: #{tpu_custom_call.1} parent=1 // pred_check_branch
      %60 = sbr.rel (0) target = $region33
    $region32: #{tpu_custom_call.1} parent=1 // pred_region
      %61 = dma.done [#allocation6], 512
    $region33: #{tpu_custom_call.1} parent=1 // pred_fallthru
      _
    %v62 = vld [vmem:[#allocation2] sm:$0xff]
    %v63 = vld [vmem:[#allocation2 + $0x8] sm:$0xff]
    %v64 = vld [vmem:[#allocation5] sm:$0xff]
    %v65 = vld [vmem:[#allocation5 + $0x8] sm:$0xff]
    %v66 = vld [vmem:[#allocation5 + $0x10] sm:$0xff]
    %v67 = vld [vmem:[#allocation5 + $0x18] sm:$0xff]
    %v68 = vld [vmem:[%s2] sm:$0x1]
    %v70 = vlaneseq
    %v71 = vshrl.u32 %v70, 7
    %v72 = vsub.s32 0, %v71
    %v73 = vrot.slane %v68, %v72
    %vm75 = vcmask 261120
    %v77 = vsel %vm75, %v62, 0
    %v80 = vsel %vm75, %v63, 0
    %82 = vmatprep.subr.mxu0 0.0
    %83 = vmatpush1.msra.mxu0 %v64
    %84 = vmatprep.subr.mxu0 0.0
    %85 = vmatpush1.msra.mxu0 %v65
    %86 = vmatprep.subr.mxu0 0.0
    %87 = vmatpush1.msra.mxu0 %v66
    %88 = vmatprep.subr.mxu0 0.0
    %89 = vmatpush1.msra.mxu0 %v67
    %90 = vmatprep.subr.mxu0 0.0
    %91 = vmatpush1.msra.mxu0 0.0
    %92 = vmatprep.subr.mxu0 0.0
    %93 = vmatpush1.msra.mxu0 0.0
    %94 = vmatprep.subr.mxu0 0.0
    %95 = vmatpush1.msra.mxu0 0.0
    %96 = vmatprep.subr.mxu0 0.0
    %97 = vmatpush1.msra.mxu0 0.0
    %98 = vmatprep.subr.mxu0 0.0
    %99 = vmatpush1.msra.mxu0 0.0
    %100 = vmatprep.subr.mxu0 0.0
    %101 = vmatpush1.msra.mxu0 0.0
    %102 = vmatprep.subr.mxu0 0.0
    %103 = vmatpush1.msra.mxu0 0.0
    %104 = vmatprep.subr.mxu0 0.0
    %105 = vmatpush1.msra.mxu0 0.0
    %106 = vmatprep.subr.mxu0 0.0
    %107 = vmatpush1.msra.mxu0 0.0
    %108 = vmatprep.subr.mxu0 0.0
    %109 = vmatpush1.msra.mxu0 0.0
    %110 = vmatprep.subr.mxu0 0.0
    %111 = vmatpush1.msra.mxu0 0.0
    %112 = vmatprep.subr.mxu0 0.0
    %113 = vmatpush1.msra.mxu0 0.0
    %114 = vmatprep.subr.mxu0 0.0
    %115 = vmatpush1.msra.mxu0 0.0
    %116 = vmatprep.subr.mxu0 0.0
    %117 = vmatpush1.msra.mxu0 0.0
    %118 = vmatprep.subr.mxu0 0.0
    %119 = vmatpush1.msra.mxu0 0.0
    %120 = vmatprep.subr.mxu0 0.0
    %121 = vmatpush1.msra.mxu0 0.0
    %122 = vmatprep.subr.mxu0 0.0
    %123 = vmatpush1.msra.mxu0 0.0
    %124 = vmatprep.subr.mxu0 0.0
    %125 = vmatpush1.msra.mxu0 0.0
    %126 = vmatprep.subr.mxu0 0.0
    %127 = vmatpush1.msra.mxu0 0.0
    %128 = vmatprep.subr.mxu0 0.0
    %129 = vmatpush1.msra.mxu0 0.0
    %130 = vmatprep.subr.mxu0 0.0
    %131 = vmatpush1.msra.mxu0 0.0
    %132 = vmatprep.subr.mxu0 0.0
    %133 = vmatpush1.msra.mxu0 0.0
    %134 = vmatprep.subr.mxu0 0.0
    %135 = vmatpush1.msra.mxu0 0.0
    %136 = vmatprep.subr.mxu0 0.0
    %137 = vmatpush1.msra.mxu0 0.0
    %138 = vmatprep.subr.mxu0 0.0
    %139 = vmatpush1.msra.mxu0 0.0
    %140 = vmatprep.subr.mxu0 0.0
    %141 = vmatpush1.msra.mxu0 0.0
    %142 = vmatprep.subr.mxu0 0.0
    %143 = vmatpush1.msra.mxu0 0.0
    %144 = vmatprep.subr.mxu0 0.0
    %145 = vmatpush1.msra.mxu0 0.0
    %146 = vmatprep.mubr.f32.mxu0 0.0
    %147 = vmatmul.mubr.f32.gmra.mrb[0].mxu0 %v77
    %v148 = vpop.f32.mrb[0].mxu0
    %v149 = vadd.f32 %v73, %v148
    %v150 = vpop.f32.mrb[0].mxu0
    %151 = vmatprep.mubr.f32.mxu0 0.0
    %152 = vmatmul.mubr.f32.gmra.mrb[0].mxu0 %v80
    %v153 = vpop.f32.mrb[0].mxu0
    %v154 = vadd.f32 %v73, %v153
    %v155 = vpop.f32.mrb[0].mxu0
    %156 = vdwg.mxu0
    %v157 = vmax.f32 %v149, 0.0
    %v158 = vmax.f32 %v154, 0.0
    %v159 = vld [vmem:[#allocation7] sm:$0xff]
    %v160 = vld [vmem:[#allocation7 + $0x8] sm:$0xff]
    %v161 = vld [vmem:[#allocation7 + $0x10] sm:$0xff]
    %v162 = vld [vmem:[#allocation7 + $0x18] sm:$0xff]
    %v163 = vld [vmem:[%s4] sm:$0x1]
    %v165 = vlaneseq
    %v166 = vshrl.u32 %v165, 7
    %v167 = vsub.s32 0, %v166
    %v168 = vrot.slane %v163, %v167
    %v171 = vsel %vm75, %v157, 0
    %v174 = vsel %vm75, %v158, 0
    %176 = vmatprep.subr.mxu0 0.0
    %177 = vmatpush1.msra.mxu0 %v159
    %178 = vmatprep.subr.mxu0 0.0
    %179 = vmatpush1.msra.mxu0 %v160
    %180 = vmatprep.subr.mxu0 0.0
    %181 = vmatpush1.msra.mxu0 %v161
    %182 = vmatprep.subr.mxu0 0.0
    %183 = vmatpush1.msra.mxu0 %v162
    %184 = vmatprep.subr.mxu0 0.0
    %185 = vmatpush1.msra.mxu0 0.0
    %186 = vmatprep.subr.mxu0 0.0
    %187 = vmatpush1.msra.mxu0 0.0
    %188 = vmatprep.subr.mxu0 0.0
    %189 = vmatpush1.msra.mxu0 0.0
    %190 = vmatprep.subr.mxu0 0.0
    %191 = vmatpush1.msra.mxu0 0.0
    %192 = vmatprep.subr.mxu0 0.0
    %193 = vmatpush1.msra.mxu0 0.0
    %194 = vmatprep.subr.mxu0 0.0
    %195 = vmatpush1.msra.mxu0 0.0
    %196 = vmatprep.subr.mxu0 0.0
    %197 = vmatpush1.msra.mxu0 0.0
    %198 = vmatprep.subr.mxu0 0.0
    %199 = vmatpush1.msra.mxu0 0.0
    %200 = vmatprep.subr.mxu0 0.0
    %201 = vmatpush1.msra.mxu0 0.0
    %202 = vmatprep.subr.mxu0 0.0
    %203 = vmatpush1.msra.mxu0 0.0
    %204 = vmatprep.subr.mxu0 0.0
    %205 = vmatpush1.msra.mxu0 0.0
    %206 = vmatprep.subr.mxu0 0.0
    %207 = vmatpush1.msra.mxu0 0.0
    %208 = vmatprep.subr.mxu0 0.0
    %209 = vmatpush1.msra.mxu0 0.0
    %210 = vmatprep.subr.mxu0 0.0
    %211 = vmatpush1.msra.mxu0 0.0
    %212 = vmatprep.subr.mxu0 0.0
    %213 = vmatpush1.msra.mxu0 0.0
    %214 = vmatprep.subr.mxu0 0.0
    %215 = vmatpush1.msra.mxu0 0.0
    %216 = vmatprep.subr.mxu0 0.0
    %217 = vmatpush1.msra.mxu0 0.0
    %218 = vmatprep.subr.mxu0 0.0
    %219 = vmatpush1.msra.mxu0 0.0
    %220 = vmatprep.subr.mxu0 0.0
    %221 = vmatpush1.msra.mxu0 0.0
    %222 = vmatprep.subr.mxu0 0.0
    %223 = vmatpush1.msra.mxu0 0.0
    %224 = vmatprep.subr.mxu0 0.0
    %225 = vmatpush1.msra.mxu0 0.0
    %226 = vmatprep.subr.mxu0 0.0
    %227 = vmatpush1.msra.mxu0 0.0
    %228 = vmatprep.subr.mxu0 0.0
    %229 = vmatpush1.msra.mxu0 0.0
    %230 = vmatprep.subr.mxu0 0.0
    %231 = vmatpush1.msra.mxu0 0.0
    %232 = vmatprep.subr.mxu0 0.0
    %233 = vmatpush1.msra.mxu0 0.0
    %234 = vmatprep.subr.mxu0 0.0
    %235 = vmatpush1.msra.mxu0 0.0
    %236 = vmatprep.subr.mxu0 0.0
    %237 = vmatpush1.msra.mxu0 0.0
    %238 = vmatprep.subr.mxu0 0.0
    %239 = vmatpush1.msra.mxu0 0.0
    %240 = vmatprep.mubr.f32.mxu0 0.0
    %241 = vmatmul.mubr.f32.gmra.mrb[0].mxu0 %v171
    %v242 = vpop.f32.mrb[0].mxu0
    %v243 = vadd.f32 %v168, %v242
    %v244 = vpop.f32.mrb[0].mxu0
    %245 = vmatprep.mubr.f32.mxu0 0.0
    %246 = vmatmul.mubr.f32.gmra.mrb[0].mxu0 %v174
    %v247 = vpop.f32.mrb[0].mxu0
    %v248 = vadd.f32 %v168, %v247
    %v249 = vpop.f32.mrb[0].mxu0
    %250 = vdwg.mxu0
    %251 = vst [vmem:[#allocation8] sm:$0xff] %v243
    %252 = vst [vmem:[#allocation8 + $0x8] sm:$0xff] %v248
    // Predicated region
    $region34: #{tpu_custom_call.1} parent=1 // pred_check
      _
    $region35: #{tpu_custom_call.1} parent=1 // pred_check_branch
      %254 = sbr.rel (0) target = $region37
    $region36: #{tpu_custom_call.1} parent=1 // pred_region
      %s256 = ssub.s32 256, 256
      %257 = vsyncadd [#allocation4], %s256
      %s258 = sshll.u32 [#allocation8], 4
      %s259 = int_to_ptr.vmem [resolvable:$true] %s258
      %264 = dma.vmem_to_hbm [thread:$0]  %s259, 256, %s5, [#allocation4], 128, 128, 8
    $region37: #{tpu_custom_call.1} parent=1 // pred_fallthru
      _
    // Predicated region
    $region38: #{tpu_custom_call.1} parent=1 // pred_check
      _
    $region39: #{tpu_custom_call.1} parent=1 // pred_check_branch
      %266 = sbr.rel (0) target = $region41
    $region40: #{tpu_custom_call.1} parent=1 // pred_region
      %267 = dma.done [#allocation4], 256
    $region41: #{tpu_custom_call.1} parent=1 // pred_fallthru
      _
    %268 = vsyncpa [#allocation3], 1
    %269 = vsyncpa [#allocation6], 1
    %270 = vsyncpa [#allocation4], 1

</llo_original>
